<compile_context>
chip_gen: v6e
topology: v6e:2x2x1
jax: 0.10.0
libtpu: 0.0.40
codegen_flags: <defaults>
</compile_context>

<pallas_src>
import jax
import jax.numpy as jnp
from jax.experimental import pallas as pl
from jax.experimental.pallas import tpu as pltpu

# TODO(synk): visdom logging / self.count bookkeeping in forward() is host-side
# visualization state with no Pallas equivalent; it does not affect the output.


def _scale_kernel(x_ref, scale_ref, bias_ref, o_ref):
    # x_ref / o_ref       : (row_blk, col_blk)
    # scale_ref / bias_ref: (row_blk, 1) [per-row params] or (1, col_blk)
    #                       [per-lane params]; either broadcasts against x.
    # Params are pre-cast to x.dtype -> single cast-free fused multiply-add.
    o_ref[...] = x_ref[...] * scale_ref[...] + bias_ref[...]


def _choose_blocks(rows, cols, itemsize, target_bytes):
    """Pick a sublane/lane-dense (row_blk, col_blk) tile of ~target_bytes."""
    sublane = {4: 8, 2: 16, 1: 32}.get(itemsize, 8)
    target_elems = max(target_bytes // itemsize, sublane * 128)

    # Lane (last) axis: full width whenever a sublane-thick full-width slab fits
    # the budget; otherwise a large multiple of 128.  Ragged tails are handled by
    # the cdiv grid (masked edge stores), never by padding the activation in HBM.
    if cols < 128 or cols * sublane <= target_elems:
        col_blk = cols
    else:
        col_blk = max(128, (target_elems // sublane) // 128 * 128)
        col_blk = min(col_blk, (cols // 128) * 128)

    # Sublane (second-to-last) axis: fill the remaining budget with a
    # sublane-multiple row block (or the whole row extent).
    row_blk = min(rows, max(sublane, target_elems // col_blk))
    if row_blk < rows:
        row_blk = (row_blk // sublane) * sublane
    return row_blk, col_blk


def scale_layer_forward(x_nchw, scale, bias, *, target_block_bytes=4 * 1024 * 1024):
    """out = x * scale + bias with per-channel scale/bias (PyTorch ScaleLayer).

    x_nchw: (N, C, H, W); scale / bias: anything reshapeable to (C,), e.g. the
    nn.Parameter shape (1, C, 1, 1).  Output keeps x's dtype; params are cast to
    x.dtype (bf16 activations => bf16-native compute, intentionally different
    from PyTorch's f32-promoting broadcast).
    """
    N, C, H, W = x_nchw.shape
    dt = x_nchw.dtype
    itemsize = jnp.dtype(dt).itemsize

    scale_c = jnp.asarray(scale, dtype=dt).reshape(C)
    bias_c = jnp.asarray(bias, dtype=dt).reshape(C)

    if H * W >= 128:
        # Layout A: rows = N*C (params vary per row), lanes = H*W.
        rows, cols = N * C, H * W
        scale_p = jnp.tile(scale_c, N).reshape(rows, 1)
        bias_p = jnp.tile(bias_c, N).reshape(rows, 1)
        per_row_params = True
    else:
        # Layout B (tiny spatial dims): rows = N, lanes = C*H*W (params vary
        # per lane), keeping stores as lane-dense as the input allows.
        rows, cols = N, C * H * W
        scale_p = jnp.repeat(scale_c, H * W).reshape(1, cols)
        bias_p = jnp.repeat(bias_c, H * W).reshape(1, cols)
        per_row_params = False

    x2d = x_nchw.reshape(rows, cols)  # free reshape, no copy

    row_blk, col_blk = _choose_blocks(rows, cols, itemsize, target_block_bytes)
    grid = (pl.cdiv(rows, row_blk), pl.cdiv(cols, col_blk))

    x_spec = pl.BlockSpec((row_blk, col_blk), lambda r, l: (r, l))
    if per_row_params:
        p_spec = pl.BlockSpec((row_blk, 1), lambda r, l: (r, 0))
    else:
        p_spec = pl.BlockSpec((1, col_blk), lambda r, l: (0, l))

    block_bytes = row_blk * col_blk * itemsize
    # x + out double-buffered plus param tiles; stays well under v7x's
    # 64 MiB-per-TC VMEM as well as v5e/v6e physical VMEM.
    vmem_limit = int(min(max(32 << 20, 5 * block_bytes), 48 << 20))

    out2d = pl.pallas_call(
        _scale_kernel,
        out_shape=jax.ShapeDtypeStruct((rows, cols), dt),
        grid_spec=pltpu.PrefetchScalarGridSpec(
            num_scalar_prefetch=0,
            grid=grid,
            in_specs=[x_spec, p_spec, p_spec],
            out_specs=pl.BlockSpec((row_blk, col_blk), lambda r, l: (r, l)),
        ),
        compiler_params=pltpu.CompilerParams(
            dimension_semantics=("parallel", "parallel"),
            vmem_limit_bytes=vmem_limit,
        ),
    )(x2d, scale_p, bias_p)

    return out2d.reshape(N, C, H, W)


def _check_case(key, shape, dtype=jnp.float32, *, module_init=True,
                target_block_bytes=4 * 1024 * 1024, rtol=1e-6, atol=1e-6):
    N, C, H, W = shape
    kx, ks, kb = jax.random.split(key, 3)
    x = jax.random.normal(kx, shape, dtype=jnp.float32).astype(dtype)
    if module_init:
        # nn.Parameter init from the module: scale = ones * 20, bias = zeros.
        scale_param = jnp.ones((1, C, 1, 1), jnp.float32) * 20.0
        bias_param = jnp.zeros((1, C, 1, 1), jnp.float32)
    else:
        scale_param = jax.random.normal(ks, (1, C, 1, 1), jnp.float32)
        bias_param = jax.random.normal(kb, (1, C, 1, 1), jnp.float32)

    out = scale_layer_forward(x, scale_param, bias_param,
                              target_block_bytes=target_block_bytes)
    out = jax.block_until_ready(out)

    ref = (x.astype(jnp.float32) * scale_param + bias_param).astype(dtype)
    assert out.shape == shape and out.dtype == dtype
    assert jnp.allclose(out.astype(jnp.float32), ref.astype(jnp.float32),
                        rtol=rtol, atol=atol), f"mismatch for shape={shape}"


if __name__ == "__main__":
    root = jax.random.PRNGKey(0)
    keys = jax.random.split(root, 5)

    # Primary case: module-sized small input with the module's parameter init.
    _check_case(keys[0], (2, 4, 16, 16))

    # Ragged / edge-block coverage (small block target to force partial tiles):
    _check_case(keys[1], (5, 4, 32, 64), module_init=False,
                target_block_bytes=64 * 1024)   # partial row (sublane) block
    _check_case(keys[2], (2, 8, 50, 50), module_init=False,
                target_block_bytes=64 * 1024)   # partial lane block + ragged H*W
    _check_case(keys[3], (2, 4, 8, 8), module_init=False)  # tiny spatial -> layout B
    _check_case(keys[4], (2, 4, 16, 16), dtype=jnp.bfloat16, module_init=False,
                rtol=5e-2, atol=5e-2)           # bf16-native compute path

    print("KERNEL_OK")
</pallas_src>

<mosaic_0001>
module attributes {stable_mosaic.version = 11 : i64} {
  func.func @_scale_kernel(%arg0: i32, %arg1: i32, %arg2: memref<8x256xf32, #tpu.memory_space<vmem>>, %arg3: memref<8x1xf32, #tpu.memory_space<vmem>>, %arg4: memref<8x1xf32, #tpu.memory_space<vmem>>, %arg5: memref<8x256xf32, #tpu.memory_space<vmem>>) attributes {dimension_semantics = [#tpu.dimension_semantics<parallel>, #tpu.dimension_semantics<parallel>], iteration_bounds = array<i64: 1, 1>, scalar_prefetch = 0 : i64, scratch_operands = 0 : i64, tpu.core_type = #tpu.core_type<tc>, window_params = [{transform_indices = @transform_0, window_bounds = array<i64: 8, 256>}, {transform_indices = @transform_1, window_bounds = array<i64: 8, 1>}, {transform_indices = @transform_2, window_bounds = array<i64: 8, 1>}, {transform_indices = @transform_3, window_bounds = array<i64: 8, 256>}]} {
    %c0 = arith.constant 0 : index
    %c0_0 = arith.constant 0 : index
    %0 = vector.load %arg2[%c0, %c0_0] : memref<8x256xf32, #tpu.memory_space<vmem>>, vector<8x256xf32>
    %c0_1 = arith.constant 0 : index
    %c0_2 = arith.constant 0 : index
    %1 = vector.load %arg3[%c0_1, %c0_2] : memref<8x1xf32, #tpu.memory_space<vmem>>, vector<8x1xf32>
    %2 = vector.broadcast %1 : vector<8x1xf32> to vector<8x256xf32>
    %3 = arith.mulf %0, %2 : vector<8x256xf32>
    %c0_3 = arith.constant 0 : index
    %c0_4 = arith.constant 0 : index
    %4 = vector.load %arg4[%c0_3, %c0_4] : memref<8x1xf32, #tpu.memory_space<vmem>>, vector<8x1xf32>
    %5 = vector.broadcast %4 : vector<8x1xf32> to vector<8x256xf32>
    %6 = arith.addf %3, %5 : vector<8x256xf32>
    %c0_5 = arith.constant 0 : index
    %c0_6 = arith.constant 0 : index
    %7 = vector.load %arg5[%c0_5, %c0_6] : memref<8x256xf32, #tpu.memory_space<vmem>>, vector<8x256xf32>
    tpu.vector_store %arg5[%c0_5, %c0_6], %6 {strides = array<i32>} : memref<8x256xf32, #tpu.memory_space<vmem>>, vector<8x256xf32>,
    return
  }
  func.func @transform_0(%arg0: i32, %arg1: i32) -> (i32, i32) {
    %c0_i32 = arith.constant 0 : i32
    return %arg0, %arg1 : i32, i32
  }
  func.func @transform_1(%arg0: i32, %arg1: i32) -> (i32, i32) {
    %c0_i32 = arith.constant 0 : i32
    %c0_i32_0 = arith.constant 0 : i32
    return %arg0, %c0_i32 : i32, i32
  }
  func.func @transform_2(%arg0: i32, %arg1: i32) -> (i32, i32) {
    %c0_i32 = arith.constant 0 : i32
    %c0_i32_0 = arith.constant 0 : i32
    return %arg0, %c0_i32 : i32, i32
  }
  func.func @transform_3(%arg0: i32, %arg1: i32) -> (i32, i32) {
    %c0_i32 = arith.constant 0 : i32
    return %arg0, %arg1 : i32, i32
  }
}

</mosaic_0001>

<llo_original>
// kernel: tpu_custom_call.1
$region0: #{tpu_custom_call.1}
  #allocation0 [shape = 'u32[]', space=smem, size = 0x4, offset = 0x4, fixed_abs, tag = 'smem constant byte address 0x4 - core index']
  #allocation1 [shape = 'u32[144,128]{1,0:T(1,128)}', space=vmem, size = 0x12000, scoped, tag = 'internal scratch']
  %s0 = inlined_call_operand.vmem [shape: f32[8,256], index: 0, kind: input, shape index: {}]
  %s1 = inlined_call_operand.vmem [shape: f32[8,1], index: 1, kind: input, shape index: {}]
  %s2 = inlined_call_operand.vmem [shape: f32[8,1], index: 2, kind: input, shape index: {}]
  %s3 = inlined_call_operand.hbm [shape: f32[8,256], index: 3, kind: output, shape index: {}]
  %s4 = sld [smem:[#allocation0]]
  $region22: #{tpu_custom_call.1} parent=0
    _
  %s6 = ssub.s32 1, %s4
  %s7 = scalar_select 0, %s6, %s4
  $region1: #{tpu_custom_call.1} parent=0
    #allocation2 [shape = 'u8[8192]{0}', space=vmem, size = 0x2000, scoped, tag = 'output window, operand 0, single buffered']
    #allocation3 [shape = 's32[1]{0}', space=sflag, size = 0x4, scoped, tag = 'scoped memory for tpu_custom_call.1']
    %8 = vsyncpa [#allocation3], 0
    // Predicated region
    $region2: #{tpu_custom_call.1} parent=1 // pred_check
      _
    $region3: #{tpu_custom_call.1} parent=1 // pred_check_branch
      %10 = sbr.rel (0) target = $region5
    $region4: #{tpu_custom_call.1} parent=1 // pred_region
      _
    $region5: #{tpu_custom_call.1} parent=1 // pred_fallthru
      _
    // Predicated region
    $region6: #{tpu_custom_call.1} parent=1 // pred_check
      _
    $region7: #{tpu_custom_call.1} parent=1 // pred_check_branch
      %12 = sbr.rel (0) target = $region9
    $region8: #{tpu_custom_call.1} parent=1 // pred_region
      _
    $region9: #{tpu_custom_call.1} parent=1 // pred_fallthru
      _
    // Predicated region
    $region10: #{tpu_custom_call.1} parent=1 // pred_check
      _
    $region11: #{tpu_custom_call.1} parent=1 // pred_check_branch
      %14 = sbr.rel (0) target = $region13
    $region12: #{tpu_custom_call.1} parent=1 // pred_region
      _
    $region13: #{tpu_custom_call.1} parent=1 // pred_fallthru
      _
    %v15 = vld [vmem:[%s0] sm:$0xff]
    %v16 = vld [vmem:[%s0 + $0x8] sm:$0xff]
    %v17 = vld [vmem:[%s1] sm:$0xff]
    %19 = vset.pattern.permute.xlu0 0
    %20 = vperm.xlu0 %19, %v17
    %v21 = vpop.permute.xlu0 %20
    %v23 = vmul.f32 %v15, %v21
    %v24 = vmul.f32 %v16, %v21
    %v25 = vld [vmem:[%s2] sm:$0xff]
    %27 = vset.pattern.permute.xlu0 0
    %28 = vperm.xlu0 %27, %v25
    %v29 = vpop.permute.xlu0 %28
    %v31 = vadd.f32 %v23, %v29
    %v32 = vadd.f32 %v24, %v29
    %33 = vst [vmem:[#allocation2] sm:$0xff] %v31
    %34 = vst [vmem:[#allocation2 + $0x8] sm:$0xff] %v32
    // Predicated region
    $region14: #{tpu_custom_call.1} parent=1 // pred_check
      _
    $region15: #{tpu_custom_call.1} parent=1 // pred_check_branch
      %36 = sbr.rel (0) target = $region17
    $region16: #{tpu_custom_call.1} parent=1 // pred_region
      %s38 = ssub.s32 256, 256
      %39 = vsyncadd [#allocation3], %s38
      %s41 = sshll.u32 [#allocation2], 4
      %s42 = int_to_ptr.vmem [resolvable:$true] %s41
      %44 = dma.vmem_to_hbm [thread:$0]  %s42, 256, %s3, [#allocation3]
    $region17: #{tpu_custom_call.1} parent=1 // pred_fallthru
      _
    // Predicated region
    $region18: #{tpu_custom_call.1} parent=1 // pred_check
      _
    $region19: #{tpu_custom_call.1} parent=1 // pred_check_branch
      %46 = sbr.rel (0) target = $region21
    $region20: #{tpu_custom_call.1} parent=1 // pred_region
      %47 = dma.done [#allocation3], 256
    $region21: #{tpu_custom_call.1} parent=1 // pred_fallthru
      _
    %48 = vsyncpa [#allocation3], 1

</llo_original>
